<compile_context>
chip_gen: v6e
topology: v6e:2x2x1
jax: 0.10.0
libtpu: 0.0.40
codegen_flags: <defaults>
</compile_context>

<pallas_src>
import jax
import jax.numpy as jnp
from jax.experimental import pallas as pl
from jax.experimental.pallas import tpu as pltpu

HIDDEN1 = 512
HIDDEN2 = 128
LANE = 128


def _round_up(x, m):
    return ((x + m - 1) // m) * m


def dqn_kernel(x_ref, w1_ref, b1_ref, w2_ref, b2_ref, w3_ref, b3_ref, o_ref):
    # x arrives in f32; cast to bf16 here (hidden under MXU work) instead of a
    # separate wrapper-side XLA cast pass over HBM.
    x_bf = x_ref[...].astype(jnp.bfloat16)
    # Layer 1: (bm, F) @ (F, 512) on the MXU (bf16 in, f32 acc), bias+ReLU in f32.
    h1 = jnp.dot(x_bf, w1_ref[...], preferred_element_type=jnp.float32)
    h1 = jnp.maximum(h1 + b1_ref[...], 0.0)
    # Layer 2: (bm, 512) @ (512, 128)
    h2 = jnp.dot(h1.astype(jnp.bfloat16), w2_ref[...],
                 preferred_element_type=jnp.float32)
    h2 = jnp.maximum(h2 + b2_ref[...], 0.0)
    # Head: (bm, 128) @ (128, out_pad) -- out padded to a lane-dense 128-wide store.
    o = jnp.dot(h2.astype(jnp.bfloat16), w3_ref[...],
                preferred_element_type=jnp.float32)
    o_ref[...] = (o + b3_ref[...]).astype(o_ref.dtype)


def _footprint_bytes(F, out_pad):
    weight_bytes = (F * HIDDEN1 + HIDDEN1 * HIDDEN2 + HIDDEN2 * out_pad) * 2
    bias_bytes = (HIDDEN1 + HIDDEN2 + out_pad) * 4
    return weight_bytes, bias_bytes


def _choose_block_b(B_pad, F, out_pad):
    """Batch tile: VMEM-sized, >=2 grid steps for B>=~256 (v7x megacore)."""
    if B_pad <= 256:
        return B_pad  # one step; batch is already 8-aligned
    # Per-row VMEM cost: double-buffered f32 x tile + f32 h1/h2 intermediates +
    # double-buffered f32 output tile.
    per_row = 2 * F * 4 + (HIDDEN1 + HIDDEN2) * 4 + 2 * out_pad * 4
    weight_bytes, bias_bytes = _footprint_bytes(F, out_pad)
    # Budget sized for v7x's 64 MiB/TC (weights conservatively counted 2x).
    budget = 20 * 1024 * 1024 - 2 * (weight_bytes + bias_bytes)
    cap = max(256, (budget // per_row) // 256 * 256)
    # At least two blocks so v7x's second TensorCore gets work; big (<=2048-row)
    # tiles amortize the ~0.35 us per-grid-step overhead on all generations.
    blk = _round_up(pl.cdiv(B_pad, 2), 256)
    return int(min(blk, cap, 2048))


def prepare_params(params):
    """One-time conversion to kernel-ready operands. Call OUTSIDE the hot path."""
    w1, b1 = params["w1"], params["b1"]
    w2, b2 = params["w2"], params["b2"]
    w3, b3 = params["w3"], params["b3"]
    out = w3.shape[1]
    out_pad = _round_up(out, LANE)
    return dict(
        w1=w1.astype(jnp.bfloat16),
        b1=jnp.asarray(b1, jnp.float32).reshape(1, HIDDEN1),
        w2=w2.astype(jnp.bfloat16),
        b2=jnp.asarray(b2, jnp.float32).reshape(1, HIDDEN2),
        w3=jnp.pad(w3, ((0, 0), (0, out_pad - out))).astype(jnp.bfloat16),
        b3=jnp.pad(jnp.asarray(b3, jnp.float32).reshape(1, out),
                   ((0, 0), (0, out_pad - out))),
        out=out,
    )


def dqn_forward(x, prep, *, block_b=None, out_dtype=jnp.float32):
    """x: (B, F) float32. prep: output of prepare_params()."""
    B, F = x.shape
    out = prep["out"]
    out_pad = prep["w3"].shape[1]

    # Pad the batch only to the f32 sublane quantum (8); the last grid block may
    # be partial (pl.cdiv grid), so we never materialize block-sized padding.
    B_pad = _round_up(max(B, 8), 8)
    x_p = x if B_pad == B else jnp.pad(x, ((0, B_pad - B), (0, 0)))

    if block_b is None:
        block_b = _choose_block_b(B_pad, F, out_pad)
    block_b = max(8, min(_round_up(block_b, 8), B_pad))
    grid = (pl.cdiv(B_pad, block_b),)

    weight_bytes, bias_bytes = _footprint_bytes(F, out_pad)
    out_bytes = jnp.dtype(out_dtype).itemsize
    flops = 2 * B_pad * (F * HIDDEN1 + HIDDEN1 * HIDDEN2 + HIDDEN2 * out_pad)
    bytes_accessed = (B_pad * F * 4 + B_pad * out_pad * out_bytes
                      + weight_bytes + bias_bytes)

    # VMEM: double-buffered f32 x/out tiles + f32 h1/h2 intermediates +
    # (conservatively) double-buffered weights/biases, 1.5x headroom,
    # capped at 32 MiB (half of v7x's 64 MiB/TC).
    vmem_est = (2 * block_b * F * 4
                + 2 * block_b * out_pad * out_bytes
                + block_b * (HIDDEN1 + HIDDEN2) * 4
                + 2 * (weight_bytes + bias_bytes))
    vmem_limit = int(min(max(int(1.5 * vmem_est), 16 * 1024 * 1024),
                         32 * 1024 * 1024))

    out_padded = pl.pallas_call(
        dqn_kernel,
        out_shape=jax.ShapeDtypeStruct((B_pad, out_pad), out_dtype),
        grid_spec=pltpu.PrefetchScalarGridSpec(
            num_scalar_prefetch=0,
            grid=grid,
            in_specs=[
                pl.BlockSpec((block_b, F), lambda i: (i, 0)),        # x tile (f32)
                pl.BlockSpec((F, HIDDEN1), lambda i: (0, 0)),        # W1 (invariant)
                pl.BlockSpec((1, HIDDEN1), lambda i: (0, 0)),        # b1
                pl.BlockSpec((HIDDEN1, HIDDEN2), lambda i: (0, 0)),  # W2 (invariant)
                pl.BlockSpec((1, HIDDEN2), lambda i: (0, 0)),        # b2
                pl.BlockSpec((HIDDEN2, out_pad), lambda i: (0, 0)),  # W3 (padded)
                pl.BlockSpec((1, out_pad), lambda i: (0, 0)),        # b3 (padded)
            ],
            out_specs=pl.BlockSpec((block_b, out_pad), lambda i: (i, 0)),
        ),
        compiler_params=pltpu.CompilerParams(
            dimension_semantics=("parallel",),
            vmem_limit_bytes=vmem_limit,
        ),
        cost_estimate=pl.CostEstimate(
            flops=flops, transcendentals=0, bytes_accessed=bytes_accessed),
    )(x_p, prep["w1"], prep["b1"], prep["w2"], prep["b2"], prep["w3"], prep["b3"])

    # Keep this call (and its consumer, e.g. argmax) inside one jit so the slice
    # fuses instead of costing an extra HBM pass.
    return out_padded[:B, :out]


def init_params(key, input_features, outputs):
    """Deterministic synthetic init matching nn.Linear shapes (stored (in, out))."""
    ks = jax.random.split(key, 6)

    def linear(kw, kb, fan_in, fan_out):
        bound = 1.0 / jnp.sqrt(fan_in)
        w = jax.random.uniform(kw, (fan_in, fan_out), jnp.float32, -bound, bound)
        b = jax.random.uniform(kb, (fan_out,), jnp.float32, -bound, bound)
        return w, b

    w1, b1 = linear(ks[0], ks[1], input_features, HIDDEN1)
    w2, b2 = linear(ks[2], ks[3], HIDDEN1, HIDDEN2)
    w3, b3 = linear(ks[4], ks[5], HIDDEN2, outputs)
    return dict(w1=w1, b1=b1, w2=w2, b2=b2, w3=w3, b3=b3)


def dqn_reference(x, p):
    # Mirrors the kernel's numerics: bf16 matmul operands, f32 accumulation/bias/ReLU.
    h1 = jnp.dot(x.astype(jnp.bfloat16), p["w1"].astype(jnp.bfloat16),
                 preferred_element_type=jnp.float32)
    h1 = jnp.maximum(h1 + p["b1"], 0.0)
    h2 = jnp.dot(h1.astype(jnp.bfloat16), p["w2"].astype(jnp.bfloat16),
                 preferred_element_type=jnp.float32)
    h2 = jnp.maximum(h2 + p["b2"], 0.0)
    o = jnp.dot(h2.astype(jnp.bfloat16), p["w3"].astype(jnp.bfloat16),
                preferred_element_type=jnp.float32)
    return o + p["b3"]


if __name__ == "__main__":
    batch = 16
    input_features = 32
    outputs = 8

    key = jax.random.PRNGKey(0)
    kx, kp = jax.random.split(key)
    x = jax.random.normal(kx, (batch, input_features), jnp.float32)
    params = init_params(kp, input_features, outputs)

    # One-time parameter prep (bf16 weights, padded head) -- not per forward call.
    prep = prepare_params(params)

    fwd = jax.jit(lambda xx: dqn_forward(xx, prep))
    out = jax.block_until_ready(fwd(x))

    ref = dqn_reference(x, params)
    assert out.shape == (batch, outputs)
    assert jnp.allclose(out, ref, atol=1e-2, rtol=1e-2), "mismatch vs reference"

    print("KERNEL_OK")
</pallas_src>

<mosaic_0001>
module attributes {stable_mosaic.version = 11 : i64} {
  func.func @dqn_kernel(%arg0: i32, %arg1: memref<16x32xf32, #tpu.memory_space<vmem>>, %arg2: memref<32x512xbf16, #tpu.memory_space<vmem>>, %arg3: memref<1x512xf32, #tpu.memory_space<vmem>>, %arg4: memref<512x128xbf16, #tpu.memory_space<vmem>>, %arg5: memref<1x128xf32, #tpu.memory_space<vmem>>, %arg6: memref<128x128xbf16, #tpu.memory_space<vmem>>, %arg7: memref<1x128xf32, #tpu.memory_space<vmem>>, %arg8: memref<16x128xf32, #tpu.memory_space<vmem>>) attributes {dimension_semantics = [#tpu.dimension_semantics<parallel>], iteration_bounds = array<i64: 1>, scalar_prefetch = 0 : i64, scratch_operands = 0 : i64, tpu.core_type = #tpu.core_type<tc>, window_params = [{transform_indices = @transform_0, window_bounds = array<i64: 16, 32>}, {pipeline_mode = #tpu.pipeline_mode<synchronous>, transform_indices = @transform_1, window_bounds = array<i64: 32, 512>}, {pipeline_mode = #tpu.pipeline_mode<synchronous>, transform_indices = @transform_2, window_bounds = array<i64: 1, 512>}, {pipeline_mode = #tpu.pipeline_mode<synchronous>, transform_indices = @transform_3, window_bounds = array<i64: 512, 128>}, {pipeline_mode = #tpu.pipeline_mode<synchronous>, transform_indices = @transform_4, window_bounds = array<i64: 1, 128>}, {pipeline_mode = #tpu.pipeline_mode<synchronous>, transform_indices = @transform_5, window_bounds = array<i64: 128, 128>}, {pipeline_mode = #tpu.pipeline_mode<synchronous>, transform_indices = @transform_6, window_bounds = array<i64: 1, 128>}, {transform_indices = @transform_7, window_bounds = array<i64: 16, 128>}]} {
    %c0 = arith.constant 0 : index
    %c0_0 = arith.constant 0 : index
    %0 = vector.load %arg1[%c0, %c0_0] : memref<16x32xf32, #tpu.memory_space<vmem>>, vector<16x32xf32>
    %1 = arith.truncf %0 : vector<16x32xf32> to vector<16x32xbf16>
    %c0_1 = arith.constant 0 : index
    %c0_2 = arith.constant 0 : index
    %2 = vector.load %arg2[%c0_1, %c0_2] : memref<32x512xbf16, #tpu.memory_space<vmem>>, vector<32x512xbf16>
    %cst = arith.constant dense<0.000000e+00> : vector<16x512xf32>
    %3 = tpu.matmul %1, %2, %cst {dimension_numbers = #tpu.dot_dimension_numbers<[1], [0], [0], [1], [0, 0, 1, 1], [], []>} : vector<16x32xbf16>, vector<32x512xbf16>, vector<16x512xf32> -> vector<16x512xf32>
    %c0_3 = arith.constant 0 : index
    %c0_4 = arith.constant 0 : index
    %4 = vector.load %arg3[%c0_3, %c0_4] : memref<1x512xf32, #tpu.memory_space<vmem>>, vector<1x512xf32>
    %5 = vector.broadcast %4 : vector<1x512xf32> to vector<16x512xf32>
    %6 = arith.addf %3, %5 : vector<16x512xf32>
    %cst_5 = arith.constant 0.000000e+00 : f32
    %7 = vector.broadcast %cst_5 : f32 to vector<16x512xf32>
    %8 = arith.maximumf %6, %7 : vector<16x512xf32>
    %9 = arith.truncf %8 : vector<16x512xf32> to vector<16x512xbf16>
    %c0_6 = arith.constant 0 : index
    %c0_7 = arith.constant 0 : index
    %10 = vector.load %arg4[%c0_6, %c0_7] : memref<512x128xbf16, #tpu.memory_space<vmem>>, vector<512x128xbf16>
    %cst_8 = arith.constant dense<0.000000e+00> : vector<16x128xf32>
    %11 = tpu.matmul %9, %10, %cst_8 {dimension_numbers = #tpu.dot_dimension_numbers<[1], [0], [0], [1], [0, 0, 1, 1], [], []>} : vector<16x512xbf16>, vector<512x128xbf16>, vector<16x128xf32> -> vector<16x128xf32>
    %c0_9 = arith.constant 0 : index
    %c0_10 = arith.constant 0 : index
    %12 = vector.load %arg5[%c0_9, %c0_10] : memref<1x128xf32, #tpu.memory_space<vmem>>, vector<1x128xf32>
    %13 = vector.broadcast %12 : vector<1x128xf32> to vector<16x128xf32>
    %14 = arith.addf %11, %13 : vector<16x128xf32>
    %cst_11 = arith.constant 0.000000e+00 : f32
    %15 = vector.broadcast %cst_11 : f32 to vector<16x128xf32>
    %16 = arith.maximumf %14, %15 : vector<16x128xf32>
    %17 = arith.truncf %16 : vector<16x128xf32> to vector<16x128xbf16>
    %c0_12 = arith.constant 0 : index
    %c0_13 = arith.constant 0 : index
    %18 = vector.load %arg6[%c0_12, %c0_13] : memref<128x128xbf16, #tpu.memory_space<vmem>>, vector<128x128xbf16>
    %cst_14 = arith.constant dense<0.000000e+00> : vector<16x128xf32>
    %19 = tpu.matmul %17, %18, %cst_14 {dimension_numbers = #tpu.dot_dimension_numbers<[1], [0], [0], [1], [0, 0, 1, 1], [], []>} : vector<16x128xbf16>, vector<128x128xbf16>, vector<16x128xf32> -> vector<16x128xf32>
    %c0_15 = arith.constant 0 : index
    %c0_16 = arith.constant 0 : index
    %20 = vector.load %arg7[%c0_15, %c0_16] : memref<1x128xf32, #tpu.memory_space<vmem>>, vector<1x128xf32>
    %21 = vector.broadcast %20 : vector<1x128xf32> to vector<16x128xf32>
    %22 = arith.addf %19, %21 : vector<16x128xf32>
    %c0_17 = arith.constant 0 : index
    %c0_18 = arith.constant 0 : index
    %23 = vector.load %arg8[%c0_17, %c0_18] : memref<16x128xf32, #tpu.memory_space<vmem>>, vector<16x128xf32>
    tpu.vector_store %arg8[%c0_17, %c0_18], %22 {strides = array<i32>} : memref<16x128xf32, #tpu.memory_space<vmem>>, vector<16x128xf32>,
    return
  }
  func.func @transform_0(%arg0: i32) -> (i32, i32) {
    %c0_i32 = arith.constant 0 : i32
    %c0_i32_0 = arith.constant 0 : i32
    return %arg0, %c0_i32 : i32, i32
  }
  func.func @transform_1(%arg0: i32) -> (i32, i32) {
    %c0_i32 = arith.constant 0 : i32
    %c0_i32_0 = arith.constant 0 : i32
    %c0_i32_1 = arith.constant 0 : i32
    return %c0_i32, %c0_i32_0 : i32, i32
  }
  func.func @transform_2(%arg0: i32) -> (i32, i32) {
    %c0_i32 = arith.constant 0 : i32
    %c0_i32_0 = arith.constant 0 : i32
    %c0_i32_1 = arith.constant 0 : i32
    return %c0_i32, %c0_i32_0 : i32, i32
  }
  func.func @transform_3(%arg0: i32) -> (i32, i32) {
    %c0_i32 = arith.constant 0 : i32
    %c0_i32_0 = arith.constant 0 : i32
    %c0_i32_1 = arith.constant 0 : i32
    return %c0_i32, %c0_i32_0 : i32, i32
  }
  func.func @transform_4(%arg0: i32) -> (i32, i32) {
    %c0_i32 = arith.constant 0 : i32
    %c0_i32_0 = arith.constant 0 : i32
    %c0_i32_1 = arith.constant 0 : i32
    return %c0_i32, %c0_i32_0 : i32, i32
  }
  func.func @transform_5(%arg0: i32) -> (i32, i32) {
    %c0_i32 = arith.constant 0 : i32
    %c0_i32_0 = arith.constant 0 : i32
    %c0_i32_1 = arith.constant 0 : i32
    return %c0_i32, %c0_i32_0 : i32, i32
  }
  func.func @transform_6(%arg0: i32) -> (i32, i32) {
    %c0_i32 = arith.constant 0 : i32
    %c0_i32_0 = arith.constant 0 : i32
    %c0_i32_1 = arith.constant 0 : i32
    return %c0_i32, %c0_i32_0 : i32, i32
  }
  func.func @transform_7(%arg0: i32) -> (i32, i32) {
    %c0_i32 = arith.constant 0 : i32
    %c0_i32_0 = arith.constant 0 : i32
    return %arg0, %c0_i32 : i32, i32
  }
}

</mosaic_0001>

<llo_original>
// kernel: _lambda_.1
$region0: #{_lambda_.1}
  #allocation0 [shape = 'u32[]', space=smem, size = 0x4, offset = 0x4, fixed_abs, tag = 'smem constant byte address 0x4 - core index']
  #allocation1 [shape = 'u32[144,128]{1,0:T(1,128)}', space=vmem, size = 0x12000, scoped, tag = 'internal scratch']
  %s0 = inlined_call_operand.hbm [shape: f32[16,32], index: 0, kind: input, shape index: {}]
  %s1 = inlined_call_operand.hbm [shape: bf16[32,512], index: 1, kind: input, shape index: {}]
  %s2 = inlined_call_operand.hbm [shape: f32[1,512], index: 2, kind: input, shape index: {}]
  %s3 = inlined_call_operand.hbm [shape: bf16[512,128], index: 3, kind: input, shape index: {}]
  %s4 = inlined_call_operand.vmem [shape: f32[1,128], index: 4, kind: input, shape index: {}]
  %s5 = inlined_call_operand.hbm [shape: bf16[128,128], index: 5, kind: input, shape index: {}]
  %s6 = inlined_call_operand.vmem [shape: f32[1,128], index: 6, kind: input, shape index: {}]
  %s7 = inlined_call_operand.vmem [shape: f32[16,128], index: 7, kind: output, shape index: {}]
  %s8 = sld [smem:[#allocation0]]
  $region58: #{_lambda_.1} parent=0
    _
  %s10 = ssub.s32 1, %s8
  %s11 = scalar_select 0, %s10, %s8
  $region1: #{_lambda_.1} parent=0
    #allocation2 [shape = 'u8[8192]{0}', space=vmem, size = 0x2000, scoped, tag = 'input window, operand 0, single buffered']
    #allocation3 [shape = 's32[1]{0}', space=sflag, size = 0x4, scoped, tag = 'scoped memory for _lambda_.1']
    #allocation4 [shape = 'u8[32768]{0}', space=vmem, size = 0x8000, scoped, tag = 'input window, operand 1, single buffered']
    #allocation5 [shape = 's32[1]{0}', space=sflag, size = 0x4, scoped, tag = 'scoped memory for _lambda_.1']
    #allocation6 [shape = 'u8[2048]{0}', space=vmem, size = 0x800, scoped, tag = 'input window, operand 2, single buffered']
    #allocation7 [shape = 'u8[131072]{0}', space=vmem, size = 0x20000, scoped, tag = 'input window, operand 3, single buffered']
    #allocation8 [shape = 's32[1]{0}', space=sflag, size = 0x4, scoped, tag = 'scoped memory for _lambda_.1']
    #allocation9 [shape = 'u8[32768]{0}', space=vmem, size = 0x8000, scoped, tag = 'input window, operand 5, single buffered']
    %12 = vsyncpa [#allocation3], 0
    %13 = vsyncpa [#allocation5], 0
    %14 = vsyncpa [#allocation8], 0
    // Predicated region
    $region2: #{_lambda_.1} parent=1 // pred_check
      _
    $region3: #{_lambda_.1} parent=1 // pred_check_branch
      %16 = sbr.rel (0) target = $region5
    $region4: #{_lambda_.1} parent=1 // pred_region
      %s18 = ssub.s32 256, 256
      %19 = vsyncadd [#allocation3], %s18
      %s20 = sshll.u32 [#allocation2], 4
      %s21 = int_to_ptr.vmem [resolvable:$true] %s20
      %26 = dma.hbm_to_vmem [thread:$0]  %s0, 256, %s21, [#allocation3], 128, 128, 8
    $region5: #{_lambda_.1} parent=1 // pred_fallthru
      _
    // Predicated region
    $region6: #{_lambda_.1} parent=1 // pred_check
      _
    $region7: #{_lambda_.1} parent=1 // pred_check_branch
      %28 = sbr.rel (0) target = $region9
    $region8: #{_lambda_.1} parent=1 // pred_region
      %s30 = ssub.s32 1024, 1024
      %31 = vsyncadd [#allocation5], %s30
      %s32 = sshll.u32 [#allocation4], 4
      %s33 = int_to_ptr.vmem [resolvable:$true] %s32
      %38 = dma.hbm_to_vmem [thread:$0]  %s1, 1024, %s33, [#allocation5], 256, 256, 16
    $region9: #{_lambda_.1} parent=1 // pred_fallthru
      _
    // Predicated region
    $region10: #{_lambda_.1} parent=1 // pred_check
      _
    $region11: #{_lambda_.1} parent=1 // pred_check_branch
      %40 = sbr.rel (0) target = $region13
    $region12: #{_lambda_.1} parent=1 // pred_region
      %s42 = ssub.s32 64, 64
      %43 = vsyncadd [#allocation5], %s42
      %s45 = sshll.u32 [#allocation6], 4
      %s46 = int_to_ptr.vmem [resolvable:$true] %s45
      %48 = dma.hbm_to_vmem [thread:$0]  %s2, 64, %s46, [#allocation5]
    $region13: #{_lambda_.1} parent=1 // pred_fallthru
      _
    // Predicated region
    $region14: #{_lambda_.1} parent=1 // pred_check
      _
    $region15: #{_lambda_.1} parent=1 // pred_check_branch
      %50 = sbr.rel (0) target = $region17
    $region16: #{_lambda_.1} parent=1 // pred_region
      %s52 = ssub.s32 4096, 4096
      %53 = vsyncadd [#allocation8], %s52
      %s54 = sshll.u32 [#allocation7], 4
      %s55 = int_to_ptr.vmem [resolvable:$true] %s54
      %60 = dma.hbm_to_vmem [thread:$0]  %s3, 4096, %s55, [#allocation8], 64, 64, 4
    $region17: #{_lambda_.1} parent=1 // pred_fallthru
      _
    // Predicated region
    $region18: #{_lambda_.1} parent=1 // pred_check
      _
    $region19: #{_lambda_.1} parent=1 // pred_check_branch
      %62 = sbr.rel (0) target = $region21
    $region20: #{_lambda_.1} parent=1 // pred_region
      _
    $region21: #{_lambda_.1} parent=1 // pred_fallthru
      _
    // Predicated region
    $region22: #{_lambda_.1} parent=1 // pred_check
      _
    $region23: #{_lambda_.1} parent=1 // pred_check_branch
      %64 = sbr.rel (0) target = $region25
    $region24: #{_lambda_.1} parent=1 // pred_region
      %s66 = ssub.s32 1024, 1024
      %67 = vsyncadd [#allocation8], %s66
      %s68 = sshll.u32 [#allocation9], 4
      %s69 = int_to_ptr.vmem [resolvable:$true] %s68
      %74 = dma.hbm_to_vmem [thread:$0]  %s5, 1024, %s69, [#allocation8], 64, 64, 4
    $region25: #{_lambda_.1} parent=1 // pred_fallthru
      _
    // Predicated region
    $region26: #{_lambda_.1} parent=1 // pred_check
      _
    $region27: #{_lambda_.1} parent=1 // pred_check_branch
      %76 = sbr.rel (0) target = $region29
    $region28: #{_lambda_.1} parent=1 // pred_region
      _
    $region29: #{_lambda_.1} parent=1 // pred_fallthru
      _
    // Predicated region
    $region30: #{_lambda_.1} parent=1 // pred_check
      _
    $region31: #{_lambda_.1} parent=1 // pred_check_branch
      %78 = sbr.rel (0) target = $region33
    $region32: #{_lambda_.1} parent=1 // pred_region
      %79 = dma.done [#allocation3], 256
    $region33: #{_lambda_.1} parent=1 // pred_fallthru
      _
    // Predicated region
    $region34: #{_lambda_.1} parent=1 // pred_check
      _
    $region35: #{_lambda_.1} parent=1 // pred_check_branch
      %81 = sbr.rel (0) target = $region37
    $region36: #{_lambda_.1} parent=1 // pred_region
      %82 = dma.done [#allocation5], 1024
    $region37: #{_lambda_.1} parent=1 // pred_fallthru
      _
    // Predicated region
    $region38: #{_lambda_.1} parent=1 // pred_check
      _
    $region39: #{_lambda_.1} parent=1 // pred_check_branch
      %84 = sbr.rel (0) target = $region41
    $region40: #{_lambda_.1} parent=1 // pred_region
      %85 = dma.done [#allocation5], 64
    $region41: #{_lambda_.1} parent=1 // pred_fallthru
      _
    // Predicated region
    $region42: #{_lambda_.1} parent=1 // pred_check
      _
    $region43: #{_lambda_.1} parent=1 // pred_check_branch
      %87 = sbr.rel (0) target = $region45
    $region44: #{_lambda_.1} parent=1 // pred_region
      %88 = dma.done [#allocation8], 4096
    $region45: #{_lambda_.1} parent=1 // pred_fallthru
      _
    // Predicated region
    $region46: #{_lambda_.1} parent=1 // pred_check
      _
    $region47: #{_lambda_.1} parent=1 // pred_check_branch
      %90 = sbr.rel (0) target = $region49
    $region48: #{_lambda_.1} parent=1 // pred_region
      %91 = dma.done [#allocation8], 1024
    $region49: #{_lambda_.1} parent=1 // pred_fallthru
      _
    %v93 = vld [vmem:[#allocation2] sm:$0xff]
    %v94 = vld [vmem:[#allocation2 + $0x8] sm:$0xff]
    %v95 = vpack.c.bf16 %v94, %v93
    %v96 = vld [vmem:[#allocation4] sm:$0xff]
    %v97 = vld [vmem:[#allocation4 + $0x8] sm:$0xff]
    %v98 = vld [vmem:[#allocation4 + $0x10] sm:$0xff]
    %v99 = vld [vmem:[#allocation4 + $0x18] sm:$0xff]
    %v100 = vld [vmem:[#allocation4 + $0x20] sm:$0xff]
    %v101 = vld [vmem:[#allocation4 + $0x28] sm:$0xff]
    %v102 = vld [vmem:[#allocation4 + $0x30] sm:$0xff]
    %v103 = vld [vmem:[#allocation4 + $0x38] sm:$0xff]
    %v104 = vld [vmem:[#allocation6] sm:$0xf]
    %v106 = vlaneseq
    %v107 = vshrl.u32 %v106, 7
    %v108 = vsub.s32 0, %v107
    %v109 = vrot.slane %v104, %v108
    %v110 = vlaneseq
    %v111 = vshrl.u32 %v110, 7
    %v112 = vsub.s32 1, %v111
    %v113 = vrot.slane %v104, %v112
    %v114 = vlaneseq
    %v115 = vshrl.u32 %v114, 7
    %v116 = vsub.s32 2, %v115
    %v117 = vrot.slane %v104, %v116
    %v118 = vlaneseq
    %v119 = vshrl.u32 %v118, 7
    %v120 = vsub.s32 3, %v119
    %v121 = vrot.slane %v104, %v120
    %v134 = vunpack.c.l.b16 %v96
    %v135 = vunpack.c.h.b16 %v96
    %v136 = vunpack.c.l.b16 %v97
    %v137 = vunpack.c.h.b16 %v97
    %v138 = vunpack.c.l.b16 %v98
    %v139 = vunpack.c.h.b16 %v98
    %v140 = vunpack.c.l.b16 %v99
    %v141 = vunpack.c.h.b16 %v99
    %v142 = vunpack.c.l.b16 %v100
    %v143 = vunpack.c.h.b16 %v100
    %v144 = vunpack.c.l.b16 %v101
    %v145 = vunpack.c.h.b16 %v101
    %v146 = vunpack.c.l.b16 %v102
    %v147 = vunpack.c.h.b16 %v102
    %v148 = vunpack.c.l.b16 %v103
    %v149 = vunpack.c.h.b16 %v103
    %v150 = vpack.c.b16 %v138, %v134
    %v151 = vpack.c.b16 %v139, %v135
    %v152 = vpack.c.b16 %v140, %v136
    %v153 = vpack.c.b16 %v141, %v137
    %v154 = vpack.c.b16 %v146, %v142
    %v155 = vpack.c.b16 %v147, %v143
    %v156 = vpack.c.b16 %v148, %v144
    %v157 = vpack.c.b16 %v149, %v145
    %vm166 = vcmask 261120
    %v168 = vsel %vm166, %v95, 0
    %170 = vmatprep.subr.bf16.mxu0 0
    %171 = vmatpush1.bf16.msra.mxu0 0
    %172 = vmatprep.subr.bf16.mxu0 0
    %173 = vmatpush1.bf16.msra.mxu0 0
    %174 = vmatprep.subr.bf16.mxu0 0
    %175 = vmatpush1.bf16.msra.mxu0 0
    %176 = vmatprep.subr.bf16.mxu0 0
    %177 = vmatpush1.bf16.msra.mxu0 0
    %178 = vmatprep.subr.bf16.mxu0 0
    %179 = vmatpush1.bf16.msra.mxu0 0
    %180 = vmatprep.subr.bf16.mxu0 0
    %181 = vmatpush1.bf16.msra.mxu0 0
    %182 = vmatprep.subr.bf16.mxu0 %v155
    %183 = vmatpush1.bf16.msra.mxu0 %v154
    %184 = vmatprep.subr.bf16.mxu0 %v151
    %185 = vmatpush1.bf16.msra.mxu0 %v150
    %186 = vmatprep.subr.bf16.mxu0 0
    %187 = vmatpush2.bf16.msra.mxu0 0
    %188 = vmatprep.subr.bf16.mxu0 0
    %189 = vmatpush2.bf16.msra.mxu0 0
    %190 = vmatprep.subr.bf16.mxu0 0
    %191 = vmatpush2.bf16.msra.mxu0 0
    %192 = vmatprep.subr.bf16.mxu0 0
    %193 = vmatpush2.bf16.msra.mxu0 0
    %194 = vmatprep.subr.bf16.mxu0 0
    %195 = vmatpush2.bf16.msra.mxu0 0
    %196 = vmatprep.subr.bf16.mxu0 0
    %197 = vmatpush2.bf16.msra.mxu0 0
    %198 = vmatprep.subr.bf16.mxu0 0
    %199 = vmatpush2.bf16.msra.mxu0 0
    %200 = vmatprep.subr.bf16.mxu0 0
    %201 = vmatpush2.bf16.msra.mxu0 0
    %202 = vmatprep.mubr.bf16.mxu0 0
    %203 = vmatmul.mubr.bf16.gmra.mxu0 %v168
    %v204 = vpop.f32.mrf.mxu0
    %v205 = vadd.f32 %v109, %v204
    %v206 = vpop.f32.mrf.mxu0
    %v207 = vadd.f32 %v113, %v206
    %v208 = vpop.f32.mrf.mxu0
    %v209 = vadd.f32 %v109, %v208
    %v210 = vpop.f32.mrf.mxu0
    %v211 = vadd.f32 %v113, %v210
    %212 = vdwg.mxu0
    %213 = vmatprep.subr.bf16.mxu0 0
    %214 = vmatpush1.bf16.msra.mxu0 0
    %215 = vmatprep.subr.bf16.mxu0 0
    %216 = vmatpush1.bf16.msra.mxu0 0
    %217 = vmatprep.subr.bf16.mxu0 0
    %218 = vmatpush1.bf16.msra.mxu0 0
    %219 = vmatprep.subr.bf16.mxu0 0
    %220 = vmatpush1.bf16.msra.mxu0 0
    %221 = vmatprep.subr.bf16.mxu0 0
    %222 = vmatpush1.bf16.msra.mxu0 0
    %223 = vmatprep.subr.bf16.mxu0 0
    %224 = vmatpush1.bf16.msra.mxu0 0
    %225 = vmatprep.subr.bf16.mxu0 %v157
    %226 = vmatpush1.bf16.msra.mxu0 %v156
    %227 = vmatprep.subr.bf16.mxu0 %v153
    %228 = vmatpush1.bf16.msra.mxu0 %v152
    %229 = vmatprep.subr.bf16.mxu0 0
    %230 = vmatpush2.bf16.msra.mxu0 0
    %231 = vmatprep.subr.bf16.mxu0 0
    %232 = vmatpush2.bf16.msra.mxu0 0
    %233 = vmatprep.subr.bf16.mxu0 0
    %234 = vmatpush2.bf16.msra.mxu0 0
    %235 = vmatprep.subr.bf16.mxu0 0
    %236 = vmatpush2.bf16.msra.mxu0 0
    %237 = vmatprep.subr.bf16.mxu0 0
    %238 = vmatpush2.bf16.msra.mxu0 0
    %239 = vmatprep.subr.bf16.mxu0 0
    %240 = vmatpush2.bf16.msra.mxu0 0
    %241 = vmatprep.subr.bf16.mxu0 0
    %242 = vmatpush2.bf16.msra.mxu0 0
    %243 = vmatprep.subr.bf16.mxu0 0
    %244 = vmatpush2.bf16.msra.mxu0 0
    %245 = vmatprep.mubr.bf16.mxu0 0
    %246 = vmatmul.mubr.bf16.gmra.mxu0 %v168
    %v247 = vpop.f32.mrf.mxu0
    %v248 = vadd.f32 %v117, %v247
    %v249 = vpop.f32.mrf.mxu0
    %v250 = vadd.f32 %v121, %v249
    %v251 = vpop.f32.mrf.mxu0
    %v252 = vadd.f32 %v117, %v251
    %v253 = vpop.f32.mrf.mxu0
    %v254 = vadd.f32 %v121, %v253
    %255 = vdwg.mxu0
    %v256 = vmax.f32 %v205, 0.0
    %v257 = vmax.f32 %v207, 0.0
    %v258 = vmax.f32 %v248, 0.0
    %v259 = vmax.f32 %v250, 0.0
    %v260 = vmax.f32 %v209, 0.0
    %v261 = vmax.f32 %v211, 0.0
    %v262 = vmax.f32 %v252, 0.0
    %v263 = vmax.f32 %v254, 0.0
    %v264 = vpack.c.bf16 %v260, %v256
    %v265 = vpack.c.bf16 %v261, %v257
    %v266 = vpack.c.bf16 %v262, %v258
    %v267 = vpack.c.bf16 %v263, %v259
    %v268 = vld [vmem:[#allocation7] sm:$0xf]
    %v269 = vld [vmem:[#allocation7 + $0x4] sm:$0xf]
    %v270 = vld [vmem:[#allocation7 + $0x8] sm:$0xf]
    %v271 = vld [vmem:[#allocation7 + $0xc] sm:$0xf]
    %v272 = vld [vmem:[#allocation7 + $0x10] sm:$0xf]
    %v273 = vld [vmem:[#allocation7 + $0x14] sm:$0xf]
    %v274 = vld [vmem:[#allocation7 + $0x18] sm:$0xf]
    %v275 = vld [vmem:[#allocation7 + $0x1c] sm:$0xf]
    %v276 = vld [vmem:[#allocation7 + $0x20] sm:$0xf]
    %v277 = vld [vmem:[#allocation7 + $0x24] sm:$0xf]
    %v278 = vld [vmem:[#allocation7 + $0x28] sm:$0xf]
    %v279 = vld [vmem:[#allocation7 + $0x2c] sm:$0xf]
    %v280 = vld [vmem:[#allocation7 + $0x30] sm:$0xf]
    %v281 = vld [vmem:[#allocation7 + $0x34] sm:$0xf]
    %v282 = vld [vmem:[#allocation7 + $0x38] sm:$0xf]
    %v283 = vld [vmem:[#allocation7 + $0x3c] sm:$0xf]
    %v284 = vld [vmem:[#allocation7 + $0x40] sm:$0xf]
    %v285 = vld [vmem:[#allocation7 + $0x44] sm:$0xf]
    %v286 = vld [vmem:[#allocation7 + $0x48] sm:$0xf]
    %v287 = vld [vmem:[#allocation7 + $0x4c] sm:$0xf]
    %v288 = vld [vmem:[#allocation7 + $0x50] sm:$0xf]
    %v289 = vld [vmem:[#allocation7 + $0x54] sm:$0xf]
    %v290 = vld [vmem:[#allocation7 + $0x58] sm:$0xf]
    %v291 = vld [vmem:[#allocation7 + $0x5c] sm:$0xf]
    %v292 = vld [vmem:[#allocation7 + $0x60] sm:$0xf]
    %v293 = vld [vmem:[#allocation7 + $0x64] sm:$0xf]
    %v294 = vld [vmem:[#allocation7 + $0x68] sm:$0xf]
    %v295 = vld [vmem:[#allocation7 + $0x6c] sm:$0xf]
    %v296 = vld [vmem:[#allocation7 + $0x70] sm:$0xf]
    %v297 = vld [vmem:[#allocation7 + $0x74] sm:$0xf]
    %v298 = vld [vmem:[#allocation7 + $0x78] sm:$0xf]
    %v299 = vld [vmem:[#allocation7 + $0x7c] sm:$0xf]
    %v300 = vld [vmem:[#allocation7 + $0x80] sm:$0xf]
    %v301 = vld [vmem:[#allocation7 + $0x84] sm:$0xf]
    %v302 = vld [vmem:[#allocation7 + $0x88] sm:$0xf]
    %v303 = vld [vmem:[#allocation7 + $0x8c] sm:$0xf]
    %v304 = vld [vmem:[#allocation7 + $0x90] sm:$0xf]
    %v305 = vld [vmem:[#allocation7 + $0x94] sm:$0xf]
    %v306 = vld [vmem:[#allocation7 + $0x98] sm:$0xf]
    %v307 = vld [vmem:[#allocation7 + $0x9c] sm:$0xf]
    %v308 = vld [vmem:[#allocation7 + $0xa0] sm:$0xf]
    %v309 = vld [vmem:[#allocation7 + $0xa4] sm:$0xf]
    %v310 = vld [vmem:[#allocation7 + $0xa8] sm:$0xf]
    %v311 = vld [vmem:[#allocation7 + $0xac] sm:$0xf]
    %v312 = vld [vmem:[#allocation7 + $0xb0] sm:$0xf]
    %v313 = vld [vmem:[#allocation7 + $0xb4] sm:$0xf]
    %v314 = vld [vmem:[#allocation7 + $0xb8] sm:$0xf]
    %v315 = vld [vmem:[#allocation7 + $0xbc] sm:$0xf]
    %v316 = vld [vmem:[#allocation7 + $0xc0] sm:$0xf]
    %v317 = vld [vmem:[#allocation7 + $0xc4] sm:$0xf]
    %v318 = vld [vmem:[#allocation7 + $0xc8] sm:$0xf]
    %v319 = vld [vmem:[#allocation7 + $0xcc] sm:$0xf]
    %v320 = vld [vmem:[#allocation7 + $0xd0] sm:$0xf]
    %v321 = vld [vmem:[#allocation7 + $0xd4] sm:$0xf]
    %v322 = vld [vmem:[#allocation7 + $0xd8] sm:$0xf]
    %v323 = vld [vmem:[#allocation7 + $0xdc] sm:$0xf]
    %v324 = vld [vmem:[#allocation7 + $0xe0] sm:$0xf]
    %v325 = vld [vmem:[#allocation7 + $0xe4] sm:$0xf]
    %v326 = vld [vmem:[#allocation7 + $0xe8] sm:$0xf]
    %v327 = vld [vmem:[#allocation7 + $0xec] sm:$0xf]
    %v328 = vld [vmem:[#allocation7 + $0xf0] sm:$0xf]
    %v329 = vld [vmem:[#allocation7 + $0xf4] sm:$0xf]
    %v330 = vld [vmem:[#allocation7 + $0xf8] sm:$0xf]
    %v331 = vld [vmem:[#allocation7 + $0xfc] sm:$0xf]
    %v332 = vld [vmem:[%s4] sm:$0x1]
    %v334 = vlaneseq
    %v335 = vshrl.u32 %v334, 7
    %v336 = vsub.s32 0, %v335
    %v337 = vrot.slane %v332, %v336
    %v403 = vunpack.c.l.b16 %v268
    %v404 = vunpack.c.l.b16 %v269
    %v405 = vunpack.c.l.b16 %v270
    %v406 = vunpack.c.l.b16 %v271
    %v407 = vunpack.c.l.b16 %v272
    %v408 = vunpack.c.l.b16 %v273
    %v409 = vunpack.c.l.b16 %v274
    %v410 = vunpack.c.l.b16 %v275
    %v411 = vunpack.c.l.b16 %v276
    %v412 = vunpack.c.l.b16 %v277
    %v413 = vunpack.c.l.b16 %v278
    %v414 = vunpack.c.l.b16 %v279
    %v415 = vunpack.c.l.b16 %v280
    %v416 = vunpack.c.l.b16 %v281
    %v417 = vunpack.c.l.b16 %v282
    %v418 = vunpack.c.l.b16 %v283
    %v419 = vunpack.c.l.b16 %v284
    %v420 = vunpack.c.l.b16 %v285
    %v421 = vunpack.c.l.b16 %v286
    %v422 = vunpack.c.l.b16 %v287
    %v423 = vunpack.c.l.b16 %v288
    %v424 = vunpack.c.l.b16 %v289
    %v425 = vunpack.c.l.b16 %v290
    %v426 = vunpack.c.l.b16 %v291
    %v427 = vunpack.c.l.b16 %v292
    %v428 = vunpack.c.l.b16 %v293
    %v429 = vunpack.c.l.b16 %v294
    %v430 = vunpack.c.l.b16 %v295
    %v431 = vunpack.c.l.b16 %v296
    %v432 = vunpack.c.l.b16 %v297
    %v433 = vunpack.c.l.b16 %v298
    %v434 = vunpack.c.l.b16 %v299
    %v435 = vunpack.c.l.b16 %v300
    %v436 = vunpack.c.l.b16 %v301
    %v437 = vunpack.c.l.b16 %v302
    %v438 = vunpack.c.l.b16 %v303
    %v439 = vunpack.c.l.b16 %v304
    %v440 = vunpack.c.l.b16 %v305
    %v441 = vunpack.c.l.b16 %v306
    %v442 = vunpack.c.l.b16 %v307
    %v443 = vunpack.c.l.b16 %v308
    %v444 = vunpack.c.l.b16 %v309
    %v445 = vunpack.c.l.b16 %v310
    %v446 = vunpack.c.l.b16 %v311
    %v447 = vunpack.c.l.b16 %v312
    %v448 = vunpack.c.l.b16 %v313
    %v449 = vunpack.c.l.b16 %v314
    %v450 = vunpack.c.l.b16 %v315
    %v451 = vunpack.c.l.b16 %v316
    %v452 = vunpack.c.l.b16 %v317
    %v453 = vunpack.c.l.b16 %v318
    %v454 = vunpack.c.l.b16 %v319
    %v455 = vunpack.c.l.b16 %v320
    %v456 = vunpack.c.l.b16 %v321
    %v457 = vunpack.c.l.b16 %v322
    %v458 = vunpack.c.l.b16 %v323
    %v459 = vunpack.c.l.b16 %v324
    %v460 = vunpack.c.l.b16 %v325
    %v461 = vunpack.c.l.b16 %v326
    %v462 = vunpack.c.l.b16 %v327
    %v463 = vunpack.c.l.b16 %v328
    %v464 = vunpack.c.l.b16 %v329
    %v465 = vunpack.c.l.b16 %v330
    %v466 = vunpack.c.l.b16 %v331
    %v467 = vpack.c.b16 %v404, %v403
    %v468 = vpack.c.b16 %v406, %v405
    %v469 = vpack.c.b16 %v408, %v407
    %v470 = vpack.c.b16 %v410, %v409
    %v471 = vpack.c.b16 %v412, %v411
    %v472 = vpack.c.b16 %v414, %v413
    %v473 = vpack.c.b16 %v416, %v415
    %v474 = vpack.c.b16 %v418, %v417
    %v475 = vpack.c.b16 %v420, %v419
    %v476 = vpack.c.b16 %v422, %v421
    %v477 = vpack.c.b16 %v424, %v423
    %v478 = vpack.c.b16 %v426, %v425
    %v479 = vpack.c.b16 %v428, %v427
    %v480 = vpack.c.b16 %v430, %v429
    %v481 = vpack.c.b16 %v432, %v431
    %v482 = vpack.c.b16 %v434, %v433
    %v483 = vpack.c.b16 %v436, %v435
    %v484 = vpack.c.b16 %v438, %v437
    %v485 = vpack.c.b16 %v440, %v439
    %v486 = vpack.c.b16 %v442, %v441
    %v487 = vpack.c.b16 %v444, %v443
    %v488 = vpack.c.b16 %v446, %v445
    %v489 = vpack.c.b16 %v448, %v447
    %v490 = vpack.c.b16 %v450, %v449
    %v491 = vpack.c.b16 %v452, %v451
    %v492 = vpack.c.b16 %v454, %v453
    %v493 = vpack.c.b16 %v456, %v455
    %v494 = vpack.c.b16 %v458, %v457
    %v495 = vpack.c.b16 %v460, %v459
    %v496 = vpack.c.b16 %v462, %v461
    %v497 = vpack.c.b16 %v464, %v463
    %v498 = vpack.c.b16 %v466, %v465
    %531 = vmatprep.subr.bf16.mxu0 0
    %532 = vmatpush1.bf16.msra.mxu0 %v474
    %533 = vmatprep.subr.bf16.mxu0 0
    %534 = vmatpush1.bf16.msra.mxu0 %v473
    %535 = vmatprep.subr.bf16.mxu0 0
    %536 = vmatpush1.bf16.msra.mxu0 %v472
    %537 = vmatprep.subr.bf16.mxu0 0
    %538 = vmatpush1.bf16.msra.mxu0 %v471
    %539 = vmatprep.subr.bf16.mxu0 0
    %540 = vmatpush1.bf16.msra.mxu0 %v470
    %541 = vmatprep.subr.bf16.mxu0 0
    %542 = vmatpush1.bf16.msra.mxu0 %v469
    %543 = vmatprep.subr.bf16.mxu0 0
    %544 = vmatpush1.bf16.msra.mxu0 %v468
    %545 = vmatprep.subr.bf16.mxu0 0
    %546 = vmatpush1.bf16.msra.mxu0 %v467
    %547 = vmatprep.subr.bf16.mxu0 0
    %548 = vmatpush2.bf16.msra.mxu0 %v482
    %549 = vmatprep.subr.bf16.mxu0 0
    %550 = vmatpush2.bf16.msra.mxu0 %v481
    %551 = vmatprep.subr.bf16.mxu0 0
    %552 = vmatpush2.bf16.msra.mxu0 %v480
    %553 = vmatprep.subr.bf16.mxu0 0
    %554 = vmatpush2.bf16.msra.mxu0 %v479
    %555 = vmatprep.subr.bf16.mxu0 0
    %556 = vmatpush2.bf16.msra.mxu0 %v478
    %557 = vmatprep.subr.bf16.mxu0 0
    %558 = vmatpush2.bf16.msra.mxu0 %v477
    %559 = vmatprep.subr.bf16.mxu0 0
    %560 = vmatpush2.bf16.msra.mxu0 %v476
    %561 = vmatprep.subr.bf16.mxu0 0
    %562 = vmatpush2.bf16.msra.mxu0 %v475
    %563 = vmatprep.mubr.bf16.mxu0 %v265
    %564 = vmatmul.mubr.bf16.gmra.mxu0 %v264
    %v565 = vpop.f32.mrf.mxu0
    %v566 = vadd.f32 %v337, %v565
    %v567 = vpop.f32.mrf.mxu0
    %v568 = vpop.f32.mrf.mxu0
    %v569 = vadd.f32 %v337, %v568
    %v570 = vpop.f32.mrf.mxu0
    %571 = vdwg.mxu0
    %572 = vmatprep.subr.bf16.mxu0 0
    %573 = vmatpush1.bf16.msra.mxu0 %v490
    %574 = vmatprep.subr.bf16.mxu0 0
    %575 = vmatpush1.bf16.msra.mxu0 %v489
    %576 = vmatprep.subr.bf16.mxu0 0
    %577 = vmatpush1.bf16.msra.mxu0 %v488
    %578 = vmatprep.subr.bf16.mxu0 0
    %579 = vmatpush1.bf16.msra.mxu0 %v487
    %580 = vmatprep.subr.bf16.mxu0 0
    %581 = vmatpush1.bf16.msra.mxu0 %v486
    %582 = vmatprep.subr.bf16.mxu0 0
    %583 = vmatpush1.bf16.msra.mxu0 %v485
    %584 = vmatprep.subr.bf16.mxu0 0
    %585 = vmatpush1.bf16.msra.mxu0 %v484
    %586 = vmatprep.subr.bf16.mxu0 0
    %587 = vmatpush1.bf16.msra.mxu0 %v483
    %588 = vmatprep.subr.bf16.mxu0 0
    %589 = vmatpush2.bf16.msra.mxu0 %v498
    %590 = vmatprep.subr.bf16.mxu0 0
    %591 = vmatpush2.bf16.msra.mxu0 %v497
    %592 = vmatprep.subr.bf16.mxu0 0
    %593 = vmatpush2.bf16.msra.mxu0 %v496
    %594 = vmatprep.subr.bf16.mxu0 0
    %595 = vmatpush2.bf16.msra.mxu0 %v495
    %596 = vmatprep.subr.bf16.mxu0 0
    %597 = vmatpush2.bf16.msra.mxu0 %v494
    %598 = vmatprep.subr.bf16.mxu0 0
    %599 = vmatpush2.bf16.msra.mxu0 %v493
    %600 = vmatprep.subr.bf16.mxu0 0
    %601 = vmatpush2.bf16.msra.mxu0 %v492
    %602 = vmatprep.subr.bf16.mxu0 0
    %603 = vmatpush2.bf16.msra.mxu0 %v491
    %604 = vmatprep.mubr.bf16.mxu0 %v267
    %605 = vmatmul.mubr.bf16.gmra.mxu0 %v266
    %v606 = vpop.f32.mrf.mxu0
    %v607 = vadd.f32 %v566, %v606
    %v608 = vpop.f32.mrf.mxu0
    %v609 = vpop.f32.mrf.mxu0
    %v610 = vadd.f32 %v569, %v609
    %v611 = vpop.f32.mrf.mxu0
    %612 = vdwg.mxu0
    %v613 = vmax.f32 %v607, 0.0
    %v614 = vmax.f32 %v610, 0.0
    %v615 = vpack.c.bf16 %v614, %v613
    %v616 = vld [vmem:[#allocation9] sm:$0xf]
    %v617 = vld [vmem:[#allocation9 + $0x4] sm:$0xf]
    %v618 = vld [vmem:[#allocation9 + $0x8] sm:$0xf]
    %v619 = vld [vmem:[#allocation9 + $0xc] sm:$0xf]
    %v620 = vld [vmem:[#allocation9 + $0x10] sm:$0xf]
    %v621 = vld [vmem:[#allocation9 + $0x14] sm:$0xf]
    %v622 = vld [vmem:[#allocation9 + $0x18] sm:$0xf]
    %v623 = vld [vmem:[#allocation9 + $0x1c] sm:$0xf]
    %v624 = vld [vmem:[#allocation9 + $0x20] sm:$0xf]
    %v625 = vld [vmem:[#allocation9 + $0x24] sm:$0xf]
    %v626 = vld [vmem:[#allocation9 + $0x28] sm:$0xf]
    %v627 = vld [vmem:[#allocation9 + $0x2c] sm:$0xf]
    %v628 = vld [vmem:[#allocation9 + $0x30] sm:$0xf]
    %v629 = vld [vmem:[#allocation9 + $0x34] sm:$0xf]
    %v630 = vld [vmem:[#allocation9 + $0x38] sm:$0xf]
    %v631 = vld [vmem:[#allocation9 + $0x3c] sm:$0xf]
    %v632 = vld [vmem:[%s6] sm:$0x1]
    %v634 = vlaneseq
    %v635 = vshrl.u32 %v634, 7
    %v636 = vsub.s32 0, %v635
    %v637 = vrot.slane %v632, %v636
    %v655 = vunpack.c.l.b16 %v616
    %v656 = vunpack.c.l.b16 %v617
    %v657 = vunpack.c.l.b16 %v618
    %v658 = vunpack.c.l.b16 %v619
    %v659 = vunpack.c.l.b16 %v620
    %v660 = vunpack.c.l.b16 %v621
    %v661 = vunpack.c.l.b16 %v622
    %v662 = vunpack.c.l.b16 %v623
    %v663 = vunpack.c.l.b16 %v624
    %v664 = vunpack.c.l.b16 %v625
    %v665 = vunpack.c.l.b16 %v626
    %v666 = vunpack.c.l.b16 %v627
    %v667 = vunpack.c.l.b16 %v628
    %v668 = vunpack.c.l.b16 %v629
    %v669 = vunpack.c.l.b16 %v630
    %v670 = vunpack.c.l.b16 %v631
    %v671 = vpack.c.b16 %v656, %v655
    %v672 = vpack.c.b16 %v658, %v657
    %v673 = vpack.c.b16 %v660, %v659
    %v674 = vpack.c.b16 %v662, %v661
    %v675 = vpack.c.b16 %v664, %v663
    %v676 = vpack.c.b16 %v666, %v665
    %v677 = vpack.c.b16 %v668, %v667
    %v678 = vpack.c.b16 %v670, %v669
    %687 = vmatprep.subr.bf16.mxu0 0
    %688 = vmatpush1.bf16.msra.mxu0 %v678
    %689 = vmatprep.subr.bf16.mxu0 0
    %690 = vmatpush1.bf16.msra.mxu0 %v677
    %691 = vmatprep.subr.bf16.mxu0 0
    %692 = vmatpush1.bf16.msra.mxu0 %v676
    %693 = vmatprep.subr.bf16.mxu0 0
    %694 = vmatpush1.bf16.msra.mxu0 %v675
    %695 = vmatprep.subr.bf16.mxu0 0
    %696 = vmatpush1.bf16.msra.mxu0 %v674
    %697 = vmatprep.subr.bf16.mxu0 0
    %698 = vmatpush1.bf16.msra.mxu0 %v673
    %699 = vmatprep.subr.bf16.mxu0 0
    %700 = vmatpush1.bf16.msra.mxu0 %v672
    %701 = vmatprep.subr.bf16.mxu0 0
    %702 = vmatpush1.bf16.msra.mxu0 %v671
    %703 = vmatprep.subr.bf16.mxu0 0
    %704 = vmatpush2.bf16.msra.mxu0 0
    %705 = vmatprep.subr.bf16.mxu0 0
    %706 = vmatpush2.bf16.msra.mxu0 0
    %707 = vmatprep.subr.bf16.mxu0 0
    %708 = vmatpush2.bf16.msra.mxu0 0
    %709 = vmatprep.subr.bf16.mxu0 0
    %710 = vmatpush2.bf16.msra.mxu0 0
    %711 = vmatprep.subr.bf16.mxu0 0
    %712 = vmatpush2.bf16.msra.mxu0 0
    %713 = vmatprep.subr.bf16.mxu0 0
    %714 = vmatpush2.bf16.msra.mxu0 0
    %715 = vmatprep.subr.bf16.mxu0 0
    %716 = vmatpush2.bf16.msra.mxu0 0
    %717 = vmatprep.subr.bf16.mxu0 0
    %718 = vmatpush2.bf16.msra.mxu0 0
    %719 = vmatprep.mubr.bf16.mxu0 0
    %720 = vmatmul.mubr.bf16.gmra.mxu0 %v615
    %v721 = vpop.f32.mrf.mxu0
    %v722 = vadd.f32 %v637, %v721
    %v723 = vpop.f32.mrf.mxu0
    %v724 = vpop.f32.mrf.mxu0
    %v725 = vadd.f32 %v637, %v724
    %v726 = vpop.f32.mrf.mxu0
    %727 = vdwg.mxu0
    %728 = vst [vmem:[%s7] sm:$0xff] %v722
    %729 = vst [vmem:[%s7 + $0x8] sm:$0xff] %v725
    // Predicated region
    $region50: #{_lambda_.1} parent=1 // pred_check
      _
    $region51: #{_lambda_.1} parent=1 // pred_check_branch
      %731 = sbr.rel (0) target = $region53
    $region52: #{_lambda_.1} parent=1 // pred_region
      _
    $region53: #{_lambda_.1} parent=1 // pred_fallthru
      _
    // Predicated region
    $region54: #{_lambda_.1} parent=1 // pred_check
      _
    $region55: #{_lambda_.1} parent=1 // pred_check_branch
      %733 = sbr.rel (0) target = $region57
    $region56: #{_lambda_.1} parent=1 // pred_region
      _
    $region57: #{_lambda_.1} parent=1 // pred_fallthru
      _
    %734 = vsyncpa [#allocation3], 1
    %735 = vsyncpa [#allocation5], 1
    %736 = vsyncpa [#allocation8], 1

</llo_original>
